<compile_context>
chip_gen: v7x
topology: tpu7x:2x2x1
jax: 0.10.0
libtpu: 0.0.40
codegen_flags: <defaults>
</compile_context>

<pallas_src>
import jax
import jax.numpy as jnp
from jax.experimental import pallas as pl
from jax.experimental.pallas import tpu as pltpu

f32, bf16 = jnp.float32, jnp.bfloat16


def _round_up(x, m):
    return ((x + m - 1) // m) * m


def _physical_vmem_bytes():
    try:
        return int(pltpu.get_tpu_info().vmem_capacity_bytes)
    except Exception:
        return 64 << 20  # conservative default (v7x per-TC)


def _mosaic_params(semantics, block_bytes):
    # Generation-aware VMEM budget: ~100 MiB usable on v5e/v6e (128 MiB
    # physical), ~48 MiB on v7x (64 MiB physical).  Per-call limit derived from
    # the tile footprint (x2 for the double-buffered pipeline) plus headroom.
    cap = int(min(max(_physical_vmem_bytes() - (16 << 20), 32 << 20), 100 << 20))
    limit = int(min(max(2 * block_bytes + (4 << 20), 16 << 20), cap))
    return pltpu.CompilerParams(dimension_semantics=semantics,
                                vmem_limit_bytes=limit)


def etm_forward(bows, normalized_bows, params, *, tb=None, tb_dec=None, tv=None):
    B, V = bows.shape
    H = params["w1"].shape[1]
    K = params["bmu"].shape[-1]
    R = params["rho"].shape[1]

    # Tile defaults: bigger vocab tiles (long efficient DMAs) and a larger
    # decode batch tile (halves beta HBM re-reads); generation-aware VMEM caps
    # keep the summed working set within budget.
    if tb is None:
        tb = B if B <= 256 else 256
    if tb_dec is None:
        tb_dec = B if B <= 512 else 512
    if tv is None:
        tv = V if V <= 4096 else 4096
    # TODO(synk): pad B / V in the wrapper when they are not tile multiples.
    assert B % tb == 0 and (tb == B or tb % 8 == 0), (B, tb)
    assert B % tb_dec == 0 and (tb_dec == B or tb_dec % 8 == 0), (B, tb_dec)
    assert V % tv == 0 and (tv == V or tv % 128 == 0), (V, tv)

    PACK = max(128, _round_up(K + 1, 128))   # [theta | kl | pad] slab width
    OUTW = 128                               # recon slab width (dense store)
    BSTAT = 128                              # [beta max | 1/sumexp | pad] slab

    # ---- parameter prep: bf16 MXU weight operands, fused mu|logsigma weight.
    # (Weights are tiny vs. the B x V activation streams, so pre-casting them
    #  once in the wrapper is fine; the activations stay f32 in HBM and are
    #  cast per-tile inside the kernels.)
    if normalized_bows.dtype != f32:
        normalized_bows = normalized_bows.astype(f32)
    if bows.dtype != f32:
        bows = bows.astype(f32)
    # TODO(synk): optionally stream bows as bf16 (exact for counts <= 256) to
    # halve the dominant decode HBM stream.
    w1 = params["w1"].astype(bf16)                                           # (V, H)
    w2 = params["w2"].astype(bf16)                                           # (H, H)
    wml = jnp.concatenate([params["wmu"], params["wls"]], axis=1).astype(bf16)  # (H, 2K)
    bml = jnp.concatenate([params["bmu"], params["bls"]], axis=1).astype(f32)   # (1, 2K)
    b1 = params["b1"].astype(f32)
    b2 = params["b2"].astype(f32)
    alphas_kr = params["alphaT"].T.astype(bf16)                              # (K, R)
    rho_rv = params["rho"].T.astype(bf16)                                    # (R, V)

    nbt, nbt_dec, nvt = B // tb, B // tb_dec, V // tv

    # ------------- 1a. streaming logsumexp over vocab for beta -------------
    def beta_stats_kernel(a_ref, r_ref, stats_ref, m_acc, l_acc):
        j = pl.program_id(0)

        @pl.when(j == 0)
        def _():
            m_acc[...] = jnp.full_like(m_acc, -jnp.inf)
            l_acc[...] = jnp.zeros_like(l_acc)

        logit = jnp.dot(a_ref[...], r_ref[...], preferred_element_type=f32)  # (K, tv)
        m_new = jnp.maximum(m_acc[...], jnp.max(logit, axis=-1, keepdims=True))
        scale = jnp.exp(m_acc[...] - m_new)
        l_acc[...] = scale * l_acc[...] + jnp.sum(jnp.exp(logit - m_new),
                                                  axis=-1, keepdims=True)
        m_acc[...] = m_new

        @pl.when(j == pl.num_programs(0) - 1)
        def _():
            inv_l = 1.0 / l_acc[...]
            stats_ref[...] = jnp.concatenate(
                [m_acc[...], inv_l, jnp.zeros((K, BSTAT - 2), f32)], axis=-1)

    bstat_block = K * R * 2 + R * tv * 2 + K * BSTAT * 4 + 2 * K * 4
    beta_stats = pl.pallas_call(
        beta_stats_kernel,
        out_shape=jax.ShapeDtypeStruct((K, BSTAT), f32),
        grid=(nvt,),
        in_specs=[pl.BlockSpec((K, R), lambda j: (0, 0)),       # alphas (resident)
                  pl.BlockSpec((R, tv), lambda j: (0, j))],     # rho tile
        out_specs=pl.BlockSpec((K, BSTAT), lambda j: (0, 0)),
        scratch_shapes=[pltpu.VMEM((K, 1), f32), pltpu.VMEM((K, 1), f32)],
        compiler_params=_mosaic_params(("arbitrary",), bstat_block),
        cost_estimate=pl.CostEstimate(
            flops=2 * K * R * V,
            transcendentals=K * V,
            bytes_accessed=K * R * 2 + R * V * 2 + K * BSTAT * 4),
    )(alphas_kr, rho_rv)

    # ------------- 1b. normalized beta in bf16, (K, V) lane-dense -------------
    def beta_norm_kernel(stats_ref, a_ref, r_ref, beta_ref):
        logit = jnp.dot(a_ref[...], r_ref[...], preferred_element_type=f32)  # (K, tv)
        m = stats_ref[:, 0:1]
        inv_l = stats_ref[:, 1:2]
        beta_ref[...] = (jnp.exp(logit - m) * inv_l).astype(bf16)

    bnorm_block = K * BSTAT * 4 + K * R * 2 + R * tv * 2 + K * tv * 2
    beta = pl.pallas_call(
        beta_norm_kernel,
        out_shape=jax.ShapeDtypeStruct((K, V), bf16),
        grid=(nvt,),
        in_specs=[pl.BlockSpec((K, BSTAT), lambda j: (0, 0)),   # [m | 1/l] slab
                  pl.BlockSpec((K, R), lambda j: (0, 0)),       # alphas (resident)
                  pl.BlockSpec((R, tv), lambda j: (0, j))],     # rho tile
        out_specs=pl.BlockSpec((K, tv), lambda j: (0, j)),
        compiler_params=_mosaic_params(("parallel",), bnorm_block),
        cost_estimate=pl.CostEstimate(
            flops=2 * K * R * V,
            transcendentals=K * V,
            bytes_accessed=R * V * 2 + K * V * 2),
    )(beta_stats, alphas_kr, rho_rv)

    # ------------- 2. encode: theta + KL packed into a lane-dense slab -------------
    def encode_kernel(nb_ref, w1_ref, b1_ref, w2_ref, b2_ref, wml_ref, bml_ref,
                      stats_ref, h1_acc):
        j = pl.program_id(1)

        @pl.when(j == 0)
        def _():
            h1_acc[...] = jnp.zeros_like(h1_acc)

        # vocab-tiled first encoder matmul; f32 HBM stream, bf16 cast in-kernel
        h1_acc[...] += jnp.dot(nb_ref[...].astype(bf16), w1_ref[...],
                               preferred_element_type=f32)

        @pl.when(j == pl.num_programs(1) - 1)
        def _():
            # TODO(synk): enc_drop dropout and the reparameterization noise are
            # training-time stochastic ops; eval-mode semantics here (z = mu).
            h1 = jnp.tanh(h1_acc[...] + b1_ref[...])
            h2 = jnp.tanh(jnp.dot(h1.astype(bf16), w2_ref[...],
                                  preferred_element_type=f32) + b2_ref[...])
            ml = jnp.dot(h2.astype(bf16), wml_ref[...],
                         preferred_element_type=f32) + bml_ref[...]   # (tb, 2K)
            mu = ml[:, :K]
            ls = ml[:, K:]
            kl = -0.5 * jnp.sum(1.0 + ls - mu * mu - jnp.exp(ls),
                                axis=-1, keepdims=True)               # (tb, 1)
            z = mu - jnp.max(mu, axis=-1, keepdims=True)
            e = jnp.exp(z)
            theta = e / jnp.sum(e, axis=-1, keepdims=True)            # (tb, K)
            # One dense, unmasked store of the [theta | kl | zeros] slab.
            stats_ref[...] = jnp.concatenate(
                [theta, kl, jnp.zeros((tb, PACK - K - 1), f32)], axis=-1)

    enc_block_bytes = (tb * tv * 4 + tv * H * 2 + H * H * 2 + H * 2 * K * 2
                       + 4 * H * 4 + tb * PACK * 4 + tb * H * 4)
    stats = pl.pallas_call(
        encode_kernel,
        out_shape=jax.ShapeDtypeStruct((B, PACK), f32),
        grid=(nbt, nvt),
        in_specs=[pl.BlockSpec((tb, tv), lambda i, j: (i, j)),      # normalized bows (f32)
                  pl.BlockSpec((tv, H), lambda i, j: (j, 0)),       # w1 slice
                  pl.BlockSpec((1, H), lambda i, j: (0, 0)),        # b1 (resident)
                  pl.BlockSpec((H, H), lambda i, j: (0, 0)),        # w2 (resident)
                  pl.BlockSpec((1, H), lambda i, j: (0, 0)),        # b2 (resident)
                  pl.BlockSpec((H, 2 * K), lambda i, j: (0, 0)),    # wmu|wls fused
                  pl.BlockSpec((1, 2 * K), lambda i, j: (0, 0))],   # bmu|bls fused
        out_specs=pl.BlockSpec((tb, PACK), lambda i, j: (i, 0)),
        scratch_shapes=[pltpu.VMEM((tb, H), f32)],
        compiler_params=_mosaic_params(("parallel", "arbitrary"), enc_block_bytes),
        cost_estimate=pl.CostEstimate(
            flops=2 * B * V * H + 2 * B * H * H + 4 * B * H * K,
            transcendentals=2 * B * H + 2 * B * K,
            bytes_accessed=B * V * 4 + V * H * 2 + H * H * 2 + 2 * H * K * 2
                           + B * PACK * 4),
    )(normalized_bows, w1, b1, w2, b2, wml, bml)

    # ------------- 3. decode: per-sample reconstruction loss -------------
    def decode_kernel(stats_ref, bows_ref, beta_ref, recon_ref, acc_ref, theta_sc):
        j = pl.program_id(1)

        @pl.when(j == 0)
        def _():
            acc_ref[...] = jnp.zeros_like(acc_ref)
            # theta slice + bf16 cast hoisted out of the vocab loop.
            theta_sc[...] = stats_ref[:, :K].astype(bf16)

        res = jnp.dot(theta_sc[...], beta_ref[...],
                      preferred_element_type=f32)                    # (tb_dec, tv)
        # TODO(synk): on v7x, if the EUP log saturates, compute log in bf16 or
        # exploit BoW sparsity via a scalar-prefetch gather of nonzero columns.
        preds = jnp.log(res + 1e-6)
        acc_ref[...] += jnp.sum(preds * bows_ref[...], axis=-1, keepdims=True)

        @pl.when(j == pl.num_programs(1) - 1)
        def _():
            recon_ref[...] = jnp.concatenate(
                [-acc_ref[...], jnp.zeros((tb_dec, OUTW - 1), f32)], axis=-1)

    dec_block_bytes = (tb_dec * PACK * 4 + tb_dec * tv * 4 + K * tv * 2
                       + tb_dec * OUTW * 4 + tb_dec * 4 + tb_dec * K * 2)
    # TODO(synk): sweep pipeline_mode=pl.Buffered(3) on the bows BlockSpec if a
    # profile shows exposed DMA in the mem-bound decode loop.
    recon_slab = pl.pallas_call(
        decode_kernel,
        out_shape=jax.ShapeDtypeStruct((B, OUTW), f32),
        grid=(nbt_dec, nvt),
        in_specs=[pl.BlockSpec((tb_dec, PACK), lambda i, j: (i, 0)),  # theta|kl slab
                  pl.BlockSpec((tb_dec, tv), lambda i, j: (i, j)),    # bows (f32)
                  pl.BlockSpec((K, tv), lambda i, j: (0, j))],        # beta (K, V) bf16
        out_specs=pl.BlockSpec((tb_dec, OUTW), lambda i, j: (i, 0)),
        scratch_shapes=[pltpu.VMEM((tb_dec, 1), f32),
                        pltpu.VMEM((tb_dec, K), bf16)],
        compiler_params=_mosaic_params(("parallel", "arbitrary"), dec_block_bytes),
        cost_estimate=pl.CostEstimate(
            flops=2 * B * K * V + 3 * B * V,
            transcendentals=B * V,
            bytes_accessed=B * V * 4 + (B // tb_dec) * K * V * 2
                           + B * PACK * 4 + B * OUTW * 4),
    )(stats, bows, beta)

    theta = stats[:, :K]
    kld_theta = jnp.mean(stats[:, K])              # mean over batch
    recon_loss = jnp.mean(recon_slab[:, 0])        # aggregate=True
    # TODO(synk): seeded-topic alpha prior (seeds/seeds_lambda) not implemented;
    # this is the seeds=None path of the PyTorch module.
    alpha_prior_loss = jnp.zeros((), f32)
    return recon_loss, kld_theta, alpha_prior_loss, theta


def reference_forward(bows, normalized_bows, p):
    """Pure-JAX reference mirroring the PyTorch forward (eval mode), using the
    same bf16-operand / f32-accumulation mixed precision as the kernels."""
    h1 = jnp.tanh(jnp.dot(normalized_bows.astype(bf16), p["w1"].astype(bf16),
                          preferred_element_type=f32) + p["b1"])
    h2 = jnp.tanh(jnp.dot(h1.astype(bf16), p["w2"].astype(bf16),
                          preferred_element_type=f32) + p["b2"])
    mu = jnp.dot(h2.astype(bf16), p["wmu"].astype(bf16),
                 preferred_element_type=f32) + p["bmu"]
    ls = jnp.dot(h2.astype(bf16), p["wls"].astype(bf16),
                 preferred_element_type=f32) + p["bls"]
    kl = jnp.mean(-0.5 * jnp.sum(1.0 + ls - mu ** 2 - jnp.exp(ls), axis=-1))
    theta = jax.nn.softmax(mu, axis=-1)
    logit = jnp.dot(p["alphaT"].T.astype(bf16), p["rho"].T.astype(bf16),
                    preferred_element_type=f32)            # (K, V)
    beta = jax.nn.softmax(logit, axis=-1)                  # (K, V), rows over vocab
    res = jnp.dot(theta.astype(bf16), beta.astype(bf16),
                  preferred_element_type=f32)
    preds = jnp.log(res + 1e-6)
    recon = jnp.mean(-jnp.sum(preds * bows, axis=1))
    return recon, kl, theta


if __name__ == "__main__":
    # small shapes consistent with the module
    B, V, H, R, K = 8, 256, 128, 128, 16   # batch, vocab, t_hidden, rho_size, topics

    key = jax.random.PRNGKey(0)
    keys = jax.random.split(key, 12)
    s = 0.05
    params = {
        "w1":    s * jax.random.normal(keys[0], (V, H), jnp.float32),
        "b1":    s * jax.random.normal(keys[1], (1, H), jnp.float32),
        "w2":    s * jax.random.normal(keys[2], (H, H), jnp.float32),
        "b2":    s * jax.random.normal(keys[3], (1, H), jnp.float32),
        "wmu":   s * jax.random.normal(keys[4], (H, K), jnp.float32),
        "bmu":   s * jax.random.normal(keys[5], (1, K), jnp.float32),
        "wls":   s * jax.random.normal(keys[6], (H, K), jnp.float32),
        "bls":   s * jax.random.normal(keys[7], (1, K), jnp.float32),
        "rho":   s * jax.random.normal(keys[8], (V, R), jnp.float32),   # rho.weight (V, rho_size)
        "alphaT": s * jax.random.normal(keys[9], (R, K), jnp.float32),  # alphas.weight^T
    }

    # deterministic bag-of-words inputs
    counts = jnp.abs(jax.random.normal(keys[10], (B, V), jnp.float32)) * 3.0
    bows = jnp.floor(counts)
    norm = jnp.maximum(jnp.sum(bows, axis=1, keepdims=True), 1.0)
    normalized_bows = bows / norm

    # tv=128 so the vocab-reduction grid axes (2 tiles) -- including the
    # streaming beta logsumexp -- are actually exercised
    recon, kl, aprior, theta = etm_forward(bows, normalized_bows, params,
                                           tb=8, tv=128)
    jax.block_until_ready((recon, kl, aprior, theta))

    r_recon, r_kl, r_theta = reference_forward(bows, normalized_bows, params)
    assert jnp.allclose(recon, r_recon, rtol=1e-3, atol=1e-3), (recon, r_recon)
    assert jnp.allclose(kl, r_kl, rtol=1e-3, atol=1e-4), (kl, r_kl)
    assert jnp.allclose(theta, r_theta, rtol=1e-3, atol=1e-4)

    print("KERNEL_OK")
</pallas_src>

<mosaic_0001>
module attributes {stable_mosaic.version = 11 : i64} {
  func.func @beta_stats_kernel(%arg0: i32, %arg1: memref<16x128xbf16, #tpu.memory_space<vmem>>, %arg2: memref<128x128xbf16, #tpu.memory_space<vmem>>, %arg3: memref<16x128xf32, #tpu.memory_space<vmem>>, %arg4: memref<16x1xf32, #tpu.memory_space<vmem>>, %arg5: memref<16x1xf32, #tpu.memory_space<vmem>>) attributes {dimension_semantics = [#tpu.dimension_semantics<arbitrary>], iteration_bounds = array<i64: 2>, scalar_prefetch = 0 : i64, scratch_operands = 2 : i64, tpu.core_type = #tpu.core_type<tc>, window_params = [{pipeline_mode = #tpu.pipeline_mode<synchronous>, transform_indices = @transform_0, window_bounds = array<i64: 16, 128>}, {transform_indices = @transform_1, window_bounds = array<i64: 128, 128>}, {pipeline_mode = #tpu.pipeline_mode<synchronous>, transform_indices = @transform_2, window_bounds = array<i64: 16, 128>}]} {
    %c0_i32 = arith.constant 0 : i32
    %0 = arith.cmpi eq, %arg0, %c0_i32 : i32
    %1 = arith.extui %0 : i1 to i32
    %c0_i32_0 = arith.constant 0 : i32
    %2 = arith.cmpi ne, %1, %c0_i32_0 : i32
    scf.if %2 {
      %cst_17 = arith.constant 0xFF800000 : f32
      %26 = vector.broadcast %cst_17 : f32 to vector<16x1xf32>
      %c0_18 = arith.constant 0 : index
      %c0_19 = arith.constant 0 : index
      %27 = vector.load %arg4[%c0_18, %c0_19] : memref<16x1xf32, #tpu.memory_space<vmem>>, vector<16x1xf32>
      tpu.vector_store %arg4[%c0_18, %c0_19], %26 {strides = array<i32>} : memref<16x1xf32, #tpu.memory_space<vmem>>, vector<16x1xf32>,
      %cst_20 = arith.constant 0.000000e+00 : f32
      %28 = vector.broadcast %cst_20 : f32 to vector<16x1xf32>
      %c0_21 = arith.constant 0 : index
      %c0_22 = arith.constant 0 : index
      %29 = vector.load %arg5[%c0_21, %c0_22] : memref<16x1xf32, #tpu.memory_space<vmem>>, vector<16x1xf32>
      tpu.vector_store %arg5[%c0_21, %c0_22], %28 {strides = array<i32>} : memref<16x1xf32, #tpu.memory_space<vmem>>, vector<16x1xf32>,
    } else {
    }
    %c0 = arith.constant 0 : index
    %c0_1 = arith.constant 0 : index
    %3 = vector.load %arg1[%c0, %c0_1] : memref<16x128xbf16, #tpu.memory_space<vmem>>, vector<16x128xbf16>
    %c0_2 = arith.constant 0 : index
    %c0_3 = arith.constant 0 : index
    %4 = vector.load %arg2[%c0_2, %c0_3] : memref<128x128xbf16, #tpu.memory_space<vmem>>, vector<128x128xbf16>
    %cst = arith.constant dense<0.000000e+00> : vector<16x128xf32>
    %5 = tpu.matmul %3, %4, %cst {dimension_numbers = #tpu.dot_dimension_numbers<[1], [0], [0], [1], [0, 0, 1, 1], [], []>} : vector<16x128xbf16>, vector<128x128xbf16>, vector<16x128xf32> -> vector<16x128xf32>
    %c0_4 = arith.constant 0 : index
    %c0_5 = arith.constant 0 : index
    %6 = vector.load %arg4[%c0_4, %c0_5] : memref<16x1xf32, #tpu.memory_space<vmem>>, vector<16x1xf32>
    %cst_6 = arith.constant dense<0xFF800000> : vector<16xf32>
    %7 = vector.multi_reduction <maximumf>, %5, %cst_6 [1] : vector<16x128xf32> to vector<16xf32>
    %8 = vector.shape_cast %7 : vector<16xf32> to vector<16x1xf32>
    %9 = arith.maximumf %6, %8 : vector<16x1xf32>
    %c0_7 = arith.constant 0 : index
    %c0_8 = arith.constant 0 : index
    %10 = vector.load %arg4[%c0_7, %c0_8] : memref<16x1xf32, #tpu.memory_space<vmem>>, vector<16x1xf32>
    %11 = arith.subf %10, %9 : vector<16x1xf32>
    %12 = math.exp %11 : vector<16x1xf32>
    %c0_9 = arith.constant 0 : index
    %c0_10 = arith.constant 0 : index
    %13 = vector.load %arg5[%c0_9, %c0_10] : memref<16x1xf32, #tpu.memory_space<vmem>>, vector<16x1xf32>
    %14 = arith.mulf %12, %13 : vector<16x1xf32>
    %15 = vector.broadcast %9 : vector<16x1xf32> to vector<16x128xf32>
    %16 = arith.subf %5, %15 : vector<16x128xf32>
    %17 = math.exp %16 : vector<16x128xf32>
    %cst_11 = arith.constant dense<0.000000e+00> : vector<16xf32>
    %18 = vector.multi_reduction <add>, %17, %cst_11 [1] : vector<16x128xf32> to vector<16xf32>
    %19 = vector.shape_cast %18 : vector<16xf32> to vector<16x1xf32>
    %20 = arith.addf %14, %19 : vector<16x1xf32>
    %c0_12 = arith.constant 0 : index
    %c0_13 = arith.constant 0 : index
    %21 = vector.load %arg5[%c0_12, %c0_13] : memref<16x1xf32, #tpu.memory_space<vmem>>, vector<16x1xf32>
    tpu.vector_store %arg5[%c0_12, %c0_13], %20 {strides = array<i32>} : memref<16x1xf32, #tpu.memory_space<vmem>>, vector<16x1xf32>,
    %c0_14 = arith.constant 0 : index
    %c0_15 = arith.constant 0 : index
    %22 = vector.load %arg4[%c0_14, %c0_15] : memref<16x1xf32, #tpu.memory_space<vmem>>, vector<16x1xf32>
    tpu.vector_store %arg4[%c0_14, %c0_15], %9 {strides = array<i32>} : memref<16x1xf32, #tpu.memory_space<vmem>>, vector<16x1xf32>,
    %c1_i32 = arith.constant 1 : i32
    %23 = arith.cmpi eq, %arg0, %c1_i32 : i32
    %24 = arith.extui %23 : i1 to i32
    %c0_i32_16 = arith.constant 0 : i32
    %25 = arith.cmpi ne, %24, %c0_i32_16 : i32
    scf.if %25 {
      %c0_17 = arith.constant 0 : index
      %c0_18 = arith.constant 0 : index
      %26 = vector.load %arg5[%c0_17, %c0_18] : memref<16x1xf32, #tpu.memory_space<vmem>>, vector<16x1xf32>
      %cst_19 = arith.constant 1.000000e+00 : f32
      %27 = vector.broadcast %cst_19 : f32 to vector<16x1xf32>
      %28 = arith.divf %27, %26 : vector<16x1xf32>
      %c0_20 = arith.constant 0 : index
      %c0_21 = arith.constant 0 : index
      %29 = vector.load %arg4[%c0_20, %c0_21] : memref<16x1xf32, #tpu.memory_space<vmem>>, vector<16x1xf32>
      %cst_22 = arith.constant 0.000000e+00 : f32
      %30 = vector.broadcast %cst_22 : f32 to vector<16x126xf32>
      %31 = tpu.concatenate %29, %28, %30 in 1 : vector<16x1xf32>, vector<16x1xf32>, vector<16x126xf32> -> vector<16x128xf32>
      %c0_23 = arith.constant 0 : index
      %c0_24 = arith.constant 0 : index
      %32 = vector.load %arg3[%c0_23, %c0_24] : memref<16x128xf32, #tpu.memory_space<vmem>>, vector<16x128xf32>
      tpu.vector_store %arg3[%c0_23, %c0_24], %31 {strides = array<i32>} : memref<16x128xf32, #tpu.memory_space<vmem>>, vector<16x128xf32>,
    } else {
    }
    return
  }
  func.func @transform_0(%arg0: i32) -> (i32, i32) {
    %c0_i32 = arith.constant 0 : i32
    %c0_i32_0 = arith.constant 0 : i32
    %c0_i32_1 = arith.constant 0 : i32
    return %c0_i32, %c0_i32_0 : i32, i32
  }
  func.func @transform_1(%arg0: i32) -> (i32, i32) {
    %c0_i32 = arith.constant 0 : i32
    %c0_i32_0 = arith.constant 0 : i32
    return %c0_i32, %arg0 : i32, i32
  }
  func.func @transform_2(%arg0: i32) -> (i32, i32) {
    %c0_i32 = arith.constant 0 : i32
    %c0_i32_0 = arith.constant 0 : i32
    %c0_i32_1 = arith.constant 0 : i32
    return %c0_i32, %c0_i32_0 : i32, i32
  }
}

</mosaic_0001>

<llo_original>
// kernel: tpu_custom_call.1
$region0: #{tpu_custom_call.1}
  #allocation0 [shape = 'u32[]', space=smem, size = 0x4, offset = 0x4, fixed_abs, tag = 'smem constant byte address 0x4 - core index']
  #allocation1 [shape = 'u32[144,128]{1,0:T(1,128)}', space=vmem, size = 0x12000, scoped, tag = 'internal scratch']
  #allocation2 [shape = 'f32[16,1]{1,0:T(8,128)}', space=vmem, size = 0x2000, scoped, tag = 'scratch operand']
  #allocation3 [shape = 'f32[16,1]{1,0:T(8,128)}', space=vmem, size = 0x2000, scoped, tag = 'scratch operand']
  %s0 = inlined_call_operand.hbm [shape: bf16[16,128], index: 0, kind: input, shape index: {}]
  %s1 = inlined_call_operand.hbm [shape: bf16[128,256], index: 1, kind: input, shape index: {}]
  %s2 = inlined_call_operand.hbm [shape: f32[16,128], index: 2, kind: output, shape index: {}]
  %s3 = sld [smem:[#allocation0]]
  $region57: #{tpu_custom_call.1} parent=0
    _
  %s5 = ssub.s32 1, %s3
  %s6 = scalar_select 0, %s5, %s3
  $region1: #{tpu_custom_call.1} parent=0
    #allocation4 [shape = 'u8[4096]{0}', space=vmem, size = 0x1000, scoped, tag = 'input window, operand 0, single buffered']
    #allocation5 [shape = 's32[2]{0}', space=sflag, size = 0x8, scoped, tag = 'scoped memory for tpu_custom_call.1']
    #allocation6 [shape = 's32[2]{0}', space=sflag, size = 0x8, scoped, tag = 'scoped memory for tpu_custom_call.1']
    #allocation7 [shape = 'u8[65536]{0}', space=vmem, size = 0x10000, scoped, tag = 'input window, operand 1']
    #allocation8 [shape = 's32[2]{0}', space=sflag, size = 0x8, scoped, tag = 'scoped memory for tpu_custom_call.1']
    #allocation9 [shape = 'u8[8192]{0}', space=vmem, size = 0x2000, scoped, tag = 'output window, operand 0, single buffered']
    %7 = vsyncpa [#allocation5], 0
    %8 = vsyncpa [#allocation8], 0
    %s9 = scalar_lea.sflag [#allocation8], 1
    %10 = vsyncpa %s9, 0
    %11 = vsyncpa [#allocation6], 0
    loop: start=0, step=1, limit=4
    $region2: #{tpu_custom_call.1} parent=1 // loop_pre_header
      _
    $region3: #{tpu_custom_call.1} parent=1 // loop_header
      %s13 = sphi 0, %s17
      %p14 = scmp.ge.s32.totalorder %s13, 4
      %s21 = sphi 0, %s21
      %s23 = sphi 0, %s21
      %s24 = sphi 0, %s23
      %s38 = sphi 0, %s24
      %s44 = sphi 0, %s46
      %s47 = sphi 0, %s44
      %s48 = sphi 0, %s47
      %s64 = sphi 0, %s48
      %s68 = sphi 0, %s68
      %s70 = sphi 0, %s68
      %s71 = sphi 0, %s70
      %s85 = sphi 0, %s71
    $region4: #{tpu_custom_call.1} parent=1 // loop_header_branch
      %16 = sbr.rel (%p14) target = $region8
    $region5: #{tpu_custom_call.1} parent=1 // loop_body
      %s18 = ssub.s32 %s13, 1
      %s19 = ssub.s32 %s13, 2
      %s20 = sadd.s32 %s13, 1
      %s22 = sadd.s32 %s21, 1
      %p25 = scmp.eq.s32.totalorder %s13, 1
      %p26 = scmp.ne.s32.totalorder %s21, %s23
      %p27 = scmp.eq.s32.totalorder %s13, 0
      %p28 = por %p26, %p27
      %p29 = scmp.ne.s32.totalorder %s21, %s23
      %p30 = scmp.eq.s32.totalorder %s18, 1
      %p31 = por %p29, %p30
      %p32 = scmp.ne.s32.totalorder %s23, %s24
      %p33 = scmp.eq.s32.totalorder %s18, 0
      %p34 = por %p32, %p33
      %p35 = scmp.ne.s32.totalorder %s23, %s24
      %p36 = scmp.eq.s32.totalorder %s19, 1
      %p37 = por %p35, %p36
      %p39 = scmp.ne.s32.totalorder %s24, %s38
      %p40 = scmp.eq.s32.totalorder %s19, 0
      %p41 = por %p39, %p40
      %s42 = ssub.s32 %s13, %s20
      %p43 = scmp.eq.s32.totalorder %s42, 0
      %s45 = sadd.s32 %s44, 1
      %s46 = scalar_select %p43, %s44, %s45
      %p49 = pneg %p43
      %p50 = scmp.eq.s32.totalorder %s13, 1
      %p51 = por %p49, %p50
      %p52 = scmp.ne.s32.totalorder %s44, %s47
      %p53 = scmp.eq.s32.totalorder %s13, 0
      %p54 = por %p52, %p53
      %p55 = scmp.ne.s32.totalorder %s44, %s47
      %p56 = scmp.eq.s32.totalorder %s18, 1
      %p57 = por %p55, %p56
      %p58 = scmp.ne.s32.totalorder %s47, %s48
      %p59 = scmp.eq.s32.totalorder %s18, 0
      %p60 = por %p58, %p59
      %p61 = scmp.ne.s32.totalorder %s47, %s48
      %p62 = scmp.eq.s32.totalorder %s19, 1
      %p63 = por %p61, %p62
      %p65 = scmp.ne.s32.totalorder %s48, %s64
      %p66 = scmp.eq.s32.totalorder %s19, 0
      %p67 = por %p65, %p66
      %s69 = sadd.s32 %s68, 1
      %p72 = scmp.eq.s32.totalorder %s13, 1
      %p73 = scmp.ne.s32.totalorder %s68, %s70
      %p74 = scmp.eq.s32.totalorder %s13, 0
      %p75 = por %p73, %p74
      %p76 = scmp.ne.s32.totalorder %s68, %s70
      %p77 = scmp.eq.s32.totalorder %s18, 1
      %p78 = por %p76, %p77
      %p79 = scmp.ne.s32.totalorder %s70, %s71
      %p80 = scmp.eq.s32.totalorder %s18, 0
      %p81 = por %p79, %p80
      %p82 = scmp.ne.s32.totalorder %s70, %s71
      %p83 = scmp.eq.s32.totalorder %s19, 1
      %p84 = por %p82, %p83
      %p86 = scmp.ne.s32.totalorder %s71, %s85
      %p87 = scmp.eq.s32.totalorder %s19, 0
      %p88 = por %p86, %p87
      %p89 = scmp.le.s32.totalorder 1, %s13
      %p90 = scmp.lt.s32.totalorder %s13, 3
      %p91 = pnand %p89, %p90
      %p92 = pneg %p91
      // Predicated region
      $region9: #{tpu_custom_call.1} parent=5 // pred_check
        _
      $region10: #{tpu_custom_call.1} parent=5 // pred_check_branch
        %94 = sbr.rel (%p91) target = $region12
      $region11: #{tpu_custom_call.1} parent=5 // pred_region
        %s95 = ssub.s32 %s13, 1
        // Predicated region
        $region13: #{tpu_custom_call.1} parent=11 // pred_check
          %p96 = pneg %p34
        $region14: #{tpu_custom_call.1} parent=11 // pred_check_branch
          %98 = sbr.rel (%p96) target = $region16
        $region15: #{tpu_custom_call.1} parent=11 // pred_region
          %s100 = ssub.s32 128, 128
          %101 = vsyncadd [#allocation5], %s100
          %s102 = sshll.u32 [#allocation4], 4
          %s103 = int_to_ptr.vmem [resolvable:$true] %s102
          %108 = dma.hbm_to_vmem [thread:$0]  %s0, 128, %s103, [#allocation5], 64, 64, 4
        $region16: #{tpu_custom_call.1} parent=11 // pred_fallthru
          _
      $region12: #{tpu_custom_call.1} parent=5 // pred_fallthru
        _
      %p109 = scmp.lt.s32.totalorder %s13, 2
      // Predicated region
      $region17: #{tpu_custom_call.1} parent=5 // pred_check
        %p110 = pneg %p109
      $region18: #{tpu_custom_call.1} parent=5 // pred_check_branch
        %112 = sbr.rel (%p110) target = $region20
      $region19: #{tpu_custom_call.1} parent=5 // pred_region
        // Predicated region
        $region21: #{tpu_custom_call.1} parent=19 // pred_check
          %p113 = pneg %p54
        $region22: #{tpu_custom_call.1} parent=19 // pred_check_branch
          %115 = sbr.rel (%p113) target = $region24
        $region23: #{tpu_custom_call.1} parent=19 // pred_region
          %s116 = sand.u32 %s44, 1
          %s117 = scalar_lea.sflag [#allocation8], %s116
          %s118 = sand.u32 %s44, 1
          %s119 = smul.addr %s118, 64
          %s120 = scalar_lea.vmem [#allocation7], %s119
          %s122 = ssub.s32 1024, 1024
          %123 = vsyncadd %s117, %s122
          %s124 = smul.addr %s13, 64
          %s125 = scalar_lea.hbm %s1, %s124
          %s126 = sshll.u32 %s120, 4
          %s127 = int_to_ptr.vmem [resolvable:$true] %s126
          %132 = dma.hbm_to_vmem [thread:$0]  %s125, 1024, %s127, %s117, 128, 64, 4
        $region24: #{tpu_custom_call.1} parent=19 // pred_fallthru
          _
      $region20: #{tpu_custom_call.1} parent=5 // pred_fallthru
        _
      %p133 = scmp.le.s32.totalorder 1, %s13
      %p134 = scmp.lt.s32.totalorder %s13, 3
      %p135 = pnand %p133, %p134
      %p136 = pneg %p135
      // Predicated region
      $region25: #{tpu_custom_call.1} parent=5 // pred_check
        _
      $region26: #{tpu_custom_call.1} parent=5 // pred_check_branch
        %138 = sbr.rel (%p135) target = $region28
      $region27: #{tpu_custom_call.1} parent=5 // pred_region
        %s139 = ssub.s32 %s13, 1
        // Predicated region
        $region29: #{tpu_custom_call.1} parent=27 // pred_check
          %p140 = pneg %p34
        $region30: #{tpu_custom_call.1} parent=27 // pred_check_branch
          %142 = sbr.rel (%p140) target = $region32
        $region31: #{tpu_custom_call.1} parent=27 // pred_region
          %143 = dma.done [#allocation5], 128
        $region32: #{tpu_custom_call.1} parent=27 // pred_fallthru
          _
        %s144 = sand.u32 %s47, 1
        %s145 = scalar_lea.sflag [#allocation8], %s144
        %s146 = sand.u32 %s47, 1
        %s147 = smul.addr %s146, 64
        %s148 = scalar_lea.vmem [#allocation7], %s147
        // Predicated region
        $region33: #{tpu_custom_call.1} parent=27 // pred_check
          %p149 = pneg %p60
        $region34: #{tpu_custom_call.1} parent=27 // pred_check_branch
          %151 = sbr.rel (%p149) target = $region36
        $region35: #{tpu_custom_call.1} parent=27 // pred_region
          %152 = dma.done %s145, 1024
        $region36: #{tpu_custom_call.1} parent=27 // pred_fallthru
          _
        %p153 = pneg %p34
        %p154 = pneg %p31
        %s155 = sand.u32 %s47, 1
        %s156 = scalar_lea.sflag [#allocation8], %s155
        %s157 = sand.u32 %s47, 1
        %s158 = smul.addr %s157, 64
        %s159 = scalar_lea.vmem [#allocation7], %s158
        %p160 = pneg %p60
        %p161 = pneg %p57
        %p162 = pneg %p81
        %p163 = pneg %p78
        %p165 = scmp.eq.s32.totalorder %s18, 0
        // Predicated region
        $region37: #{tpu_custom_call.1} parent=27 // pred_check
          %p166 = pneg %p165
        $region38: #{tpu_custom_call.1} parent=27 // pred_check_branch
          %168 = sbr.rel (%p166) target = $region40
        $region39: #{tpu_custom_call.1} parent=27 // pred_region
          %vm169 = vcmask 7168
          %170 = vst.msk [vmem:[#allocation2] sm:$0xff] %vm169, -inf
          %171 = vst.msk [vmem:[#allocation2 + $0x8] sm:$0xff] %vm169, -inf
          %172 = vst.msk [vmem:[#allocation3] sm:$0xff] %vm169, 0.0
          %173 = vst.msk [vmem:[#allocation3 + $0x8] sm:$0xff] %vm169, 0.0
        $region40: #{tpu_custom_call.1} parent=27 // pred_fallthru
          _
        %v174 = vld [vmem:[#allocation4] sm:$0xf]
        %v175 = vld [vmem:[#allocation4 + $0x4] sm:$0xf]
        %v176 = vld [vmem:[%s148] sm:$0xf]
        %v177 = vld [vmem:[%s148 + $0x4] sm:$0xf]
        %v178 = vld [vmem:[%s148 + $0x8] sm:$0xf]
        %v179 = vld [vmem:[%s148 + $0xc] sm:$0xf]
        %v180 = vld [vmem:[%s148 + $0x10] sm:$0xf]
        %v181 = vld [vmem:[%s148 + $0x14] sm:$0xf]
        %v182 = vld [vmem:[%s148 + $0x18] sm:$0xf]
        %v183 = vld [vmem:[%s148 + $0x1c] sm:$0xf]
        %v184 = vld [vmem:[%s148 + $0x20] sm:$0xf]
        %v185 = vld [vmem:[%s148 + $0x24] sm:$0xf]
        %v186 = vld [vmem:[%s148 + $0x28] sm:$0xf]
        %v187 = vld [vmem:[%s148 + $0x2c] sm:$0xf]
        %v188 = vld [vmem:[%s148 + $0x30] sm:$0xf]
        %v189 = vld [vmem:[%s148 + $0x34] sm:$0xf]
        %v190 = vld [vmem:[%s148 + $0x38] sm:$0xf]
        %v191 = vld [vmem:[%s148 + $0x3c] sm:$0xf]
        %v194 = vunpack.c.l.b16 %v174
        %v195 = vunpack.c.l.b16 %v175
        %v196 = vpack.c.b16 %v195, %v194
        %v214 = vunpack.c.l.b16 %v176
        %v215 = vunpack.c.l.b16 %v177
        %v216 = vunpack.c.l.b16 %v178
        %v217 = vunpack.c.l.b16 %v179
        %v218 = vunpack.c.l.b16 %v180
        %v219 = vunpack.c.l.b16 %v181
        %v220 = vunpack.c.l.b16 %v182
        %v221 = vunpack.c.l.b16 %v183
        %v222 = vunpack.c.l.b16 %v184
        %v223 = vunpack.c.l.b16 %v185
        %v224 = vunpack.c.l.b16 %v186
        %v225 = vunpack.c.l.b16 %v187
        %v226 = vunpack.c.l.b16 %v188
        %v227 = vunpack.c.l.b16 %v189
        %v228 = vunpack.c.l.b16 %v190
        %v229 = vunpack.c.l.b16 %v191
        %v230 = vpack.c.b16 %v215, %v214
        %v231 = vpack.c.b16 %v217, %v216
        %v232 = vpack.c.b16 %v219, %v218
        %v233 = vpack.c.b16 %v221, %v220
        %v234 = vpack.c.b16 %v223, %v222
        %v235 = vpack.c.b16 %v225, %v224
        %v236 = vpack.c.b16 %v227, %v226
        %v237 = vpack.c.b16 %v229, %v228
        %246 = vmatprep.subr.bf16.mxu0 0
        %247 = vmatpush1.bf16.msra.mxu0 %v230
        %248 = vmatprep.subr.bf16.mxu0 0
        %249 = vmatpush1.bf16.msra.mxu0 %v231
        %250 = vmatprep.subr.bf16.mxu0 0
        %251 = vmatpush1.bf16.msra.mxu0 %v232
        %252 = vmatprep.subr.bf16.mxu0 0
        %253 = vmatpush1.bf16.msra.mxu0 %v233
        %254 = vmatprep.subr.bf16.mxu0 0
        %255 = vmatpush1.bf16.msra.mxu0 %v234
        %256 = vmatprep.subr.bf16.mxu0 0
        %257 = vmatpush1.bf16.msra.mxu0 %v235
        %258 = vmatprep.subr.bf16.mxu0 0
        %259 = vmatpush1.bf16.msra.mxu0 %v236
        %260 = vmatprep.subr.bf16.mxu0 0
        %261 = vmatpush1.bf16.msra.mxu0 %v237
        %262 = vmatprep.subr.bf16.mxu0 0
        %263 = vmatpush1.bf16.msra.mxu0 0
        %264 = vmatprep.subr.bf16.mxu0 0
        %265 = vmatpush1.bf16.msra.mxu0 0
        %266 = vmatprep.subr.bf16.mxu0 0
        %267 = vmatpush1.bf16.msra.mxu0 0
        %268 = vmatprep.subr.bf16.mxu0 0
        %269 = vmatpush1.bf16.msra.mxu0 0
        %270 = vmatprep.subr.bf16.mxu0 0
        %271 = vmatpush1.bf16.msra.mxu0 0
        %272 = vmatprep.subr.bf16.mxu0 0
        %273 = vmatpush1.bf16.msra.mxu0 0
        %274 = vmatprep.subr.bf16.mxu0 0
        %275 = vmatpush1.bf16.msra.mxu0 0
        %276 = vmatprep.subr.bf16.mxu0 0
        %277 = vmatpush1.bf16.msra.mxu0 0
        %278 = vmatprep.mubr.bf16.mxu0 0
        %279 = vmatmul.mubr.bf16.gmra.mrb[0].mxu0 %v196
        %v280 = vpop.f32.mrb[0].mxu0
        %v281 = vadd.f32 0.0, %v280
        %v282 = vpop.f32.mrb[0].mxu0
        %v283 = vpop.f32.mrb[0].mxu0
        %v284 = vadd.f32 0.0, %v283
        %v285 = vpop.f32.mrb[0].mxu0
        %286 = vdwg.mxu0
        %v287 = vld [vmem:[#allocation2] sm:$0xff]
        %v288 = vld [vmem:[#allocation2 + $0x8] sm:$0xff]
        %289 = vmax.xlane.f32.xlu0 %v281
        %v290 = vpop.xlane.xlu0 %289
        %291 = vmax.xlane.f32.xlu0 %v284
        %v292 = vpop.xlane.xlu0 %291
        %v293 = vmax.f32 %v287, %v290
        %v294 = vmax.f32 %v288, %v292
        %v295 = vsub.f32 %v287, %v293
        %v296 = vsub.f32 %v288, %v294
        %v297 = vmul.f32 %v295, 1.442695
        %v298 = vpow.pop %v297
        %v299 = vmul.f32 %v296, 1.442695
        %v300 = vpow.pop %v299
        %v301 = vld [vmem:[#allocation3] sm:$0xff]
        %v302 = vld [vmem:[#allocation3 + $0x8] sm:$0xff]
        %v303 = vmul.f32 %v298, %v301
        %v304 = vmul.f32 %v300, %v302
        %306 = vset.pattern.permute.xlu0 0
        %307 = vperm.xlu0 %306, %v293
        %v308 = vpop.permute.xlu0 %307
        %311 = vset.pattern.permute.xlu0 0
        %312 = vperm.xlu0 %311, %v294
        %v313 = vpop.permute.xlu0 %312
        %v315 = vsub.f32 %v281, %v308
        %v316 = vsub.f32 %v284, %v313
        %v317 = vmul.f32 %v315, 1.442695
        %v318 = vpow.pop %v317
        %v319 = vmul.f32 %v316, 1.442695
        %v320 = vpow.pop %v319
        %321 = vadd.xlane.f32.xlu0 %v318
        %v322 = vpop.xlane.xlu0 %321
        %323 = vadd.xlane.f32.xlu0 %v320
        %v324 = vpop.xlane.xlu0 %323
        %v325 = vadd.f32 %v303, %v322
        %v326 = vadd.f32 %v304, %v324
        %vm327 = vcmask 7168
        %328 = vst.msk [vmem:[#allocation3] sm:$0xff] %vm327, %v325
        %329 = vst.msk [vmem:[#allocation3 + $0x8] sm:$0xff] %vm327, %v326
        %330 = vst.msk [vmem:[#allocation2] sm:$0xff] %vm327, %v293
        %331 = vst.msk [vmem:[#allocation2 + $0x8] sm:$0xff] %vm327, %v294
        %p332 = scmp.eq.s32.totalorder %s18, 1
        // Predicated region
        $region41: #{tpu_custom_call.1} parent=27 // pred_check
          %p333 = pneg %p332
        $region42: #{tpu_custom_call.1} parent=27 // pred_check_branch
          %335 = sbr.rel (%p333) target = $region44
        $region43: #{tpu_custom_call.1} parent=27 // pred_region
          %v336 = vld [vmem:[#allocation3] sm:$0xff]
          %v337 = vld [vmem:[#allocation3 + $0x8] sm:$0xff]
          %v338 = vrcp.pop %v336
          %v339 = vmul.f32 1.0, %v338
          %v340 = vrcp.pop %v337
          %v341 = vmul.f32 1.0, %v340
          %v342 = vld [vmem:[#allocation2] sm:$0xff]
          %v343 = vld [vmem:[#allocation2 + $0x8] sm:$0xff]
          %346 = vrot.lane.b32.xlu0 %v339, 1
          %v347 = vpop.permute.xlu0 %346
          %348 = vrot.lane.b32.xlu0 %v341, 1
          %v349 = vpop.permute.xlu0 %348
          %v352 = vsel %vm327, %v342, %v347
          %v353 = vsel %vm327, %v343, %v349
          %vm354 = vcmask 15360
          %v355 = vsel %vm354, %v352, 0.0
          %v356 = vsel %vm354, %v353, 0.0
          %357 = vst [vmem:[#allocation9] sm:$0xff] %v355
          %358 = vst [vmem:[#allocation9 + $0x8] sm:$0xff] %v356
        $region44: #{tpu_custom_call.1} parent=27 // pred_fallthru
          _
        // Predicated region
        $region45: #{tpu_custom_call.1} parent=27 // pred_check
          %p359 = pneg %p78
        $region46: #{tpu_custom_call.1} parent=27 // pred_check_branch
          %361 = sbr.rel (%p359) target = $region48
        $region47: #{tpu_custom_call.1} parent=27 // pred_region
          %s363 = ssub.s32 256, 256
          %364 = vsyncadd [#allocation6], %s363
          %s365 = sshll.u32 [#allocation9], 4
          %s366 = int_to_ptr.vmem [resolvable:$true] %s365
          %371 = dma.vmem_to_hbm [thread:$0]  %s366, 256, %s2, [#allocation6], 128, 128, 8
        $region48: #{tpu_custom_call.1} parent=27 // pred_fallthru
          _
        // Predicated region
        $region49: #{tpu_custom_call.1} parent=27 // pred_check
          %p372 = pneg %p78
        $region50: #{tpu_custom_call.1} parent=27 // pred_check_branch
          %374 = sbr.rel (%p372) target = $region52
        $region51: #{tpu_custom_call.1} parent=27 // pred_region
          %375 = dma.done [#allocation6], 256
        $region52: #{tpu_custom_call.1} parent=27 // pred_fallthru
          _
      $region28: #{tpu_custom_call.1} parent=5 // pred_fallthru
        _
      %p376 = scmp.le.s32.totalorder 2, %s13
      // Predicated region
      $region53: #{tpu_custom_call.1} parent=5 // pred_check
        %p377 = pneg %p376
      $region54: #{tpu_custom_call.1} parent=5 // pred_check_branch
        %379 = sbr.rel (%p377) target = $region56
      $region55: #{tpu_custom_call.1} parent=5 // pred_region
        %s380 = ssub.s32 %s13, 2
      $region56: #{tpu_custom_call.1} parent=5 // pred_fallthru
        _
    $region6: #{tpu_custom_call.1} parent=1 // loop_footer
      %s17 = sadd.s32 1, %s13
    $region7: #{tpu_custom_call.1} parent=1 // loop_footer_branch
      %12 = sbr.rel target = $region3
    $region8: #{tpu_custom_call.1} parent=1 // loop_exit
      _
    %381 = vsyncpa [#allocation5], 1
    %s382 = scalar_lea.sflag [#allocation5], 1
    %383 = vsyncpa %s382, 1
    %384 = vsyncpa [#allocation8], 1
    %s385 = scalar_lea.sflag [#allocation8], 1
    %386 = vsyncpa %s385, 1
    %387 = vsyncpa [#allocation6], 1
    %s388 = scalar_lea.sflag [#allocation6], 1
    %389 = vsyncpa %s388, 1

</llo_original>
